<compile_context>
chip_gen: v5e
topology: v5e:2x2
jax: 0.10.0
libtpu: 0.0.40
codegen_flags: <defaults>
</compile_context>

<pallas_src>
import jax
import jax.numpy as jnp
from jax.experimental import pallas as pl
from jax.experimental.pallas import tpu as pltpu


_TARGET_TILE_BYTES = 8 * 1024 * 1024   # per-tile budget (double-buffered in+out ~= 4x)
_MAX_COL_TILE = 4096                    # elements along the lane axis per tile
_VMEM_CAP_BYTES = 48 * 1024 * 1024      # stay well under v7x's 64 MiB per-TC VMEM


def _scaling_kernel(x_ref, scale_ref, bias_ref, o_ref):
    # y = x * (1/std) - mean/std  == (x - mean) / std, computed in f32.
    # scale/bias are either (tr, 1) per-row columns or (1, tc) per-lane rows;
    # either way a single VPU broadcast multiply-subtract.
    x = x_ref[...].astype(jnp.float32)
    o_ref[...] = (x * scale_ref[...] - bias_ref[...]).astype(o_ref.dtype)


def _sublane_align(dtype):
    """Native sublane count: 8 for 32-bit, 16 for 16-bit, 32 for 8-bit dtypes."""
    itemsize = jnp.dtype(dtype).itemsize
    return 8 * max(1, 4 // itemsize)


def _pick_col_tile(ncol, target=_MAX_COL_TILE):
    """Full extent if it fits, else the largest 128-multiple <= target that
    divides ncol (no ragged masked last block); else largest 128-multiple."""
    if ncol <= target:
        return ncol                       # full-dim block is always legal
    top = (target // 128) * 128
    for cand in range(top, 0, -128):
        if ncol % cand == 0:
            return cand
    return max(top, 128)


def _pick_row_tile(nrow, align, target):
    """Full extent if it fits, else an `align`-multiple tile <= target."""
    if nrow <= target:
        return nrow
    return max((target // align) * align, align)


def custom_scaling_layer(x, mean, std, *, donate_x=False):
    """(x - mean) / std with per-channel mean/std, x in NCHW."""
    N, C, H, W = x.shape
    assert mean.shape == (C,) and std.shape == (C,)
    HW = H * W
    itemsize = jnp.dtype(x.dtype).itemsize
    row_align = _sublane_align(x.dtype)

    # Per-channel scale/bias, kept in f32 (O(C) / O(C*H*W) wrapper work).
    inv_std = 1.0 / std.astype(jnp.float32)
    bias_c = mean.astype(jnp.float32) * inv_std

    # ---- Lane-aware 2D view selection -------------------------------------
    if HW % 128 == 0 and HW >= 128:
        # (N*C, H*W): lane dim is 128-dense; scale/bias become (N*C, 1) columns.
        nrow, ncol = N * C, HW
        x2d = x.reshape(nrow, ncol)
        scale2d = jnp.broadcast_to(inv_std[None, :], (N, C)).reshape(nrow, 1)
        bias2d = jnp.broadcast_to(bias_c[None, :], (N, C)).reshape(nrow, 1)
        per_row_stats = True
    else:
        # Small / non-128-multiple feature maps: (N, C*H*W) keeps the lane
        # dimension large; scale/bias expanded once to a (1, C*H*W) f32 row.
        nrow, ncol = N, C * HW
        x2d = x.reshape(nrow, ncol)
        scale2d = jnp.repeat(inv_std, HW).reshape(1, ncol)
        bias2d = jnp.repeat(bias_c, HW).reshape(1, ncol)
        per_row_stats = False

    # ---- Tile selection ----------------------------------------------------
    tc = _pick_col_tile(ncol)
    row_budget = max(row_align, _TARGET_TILE_BYTES // max(1, tc * itemsize))
    tr = _pick_row_tile(nrow, row_align, row_budget)

    # Guarantee >=2 grid steps on large tensors so megacore (v7x) has work
    # to shard across its two TensorCores.
    total_bytes = nrow * ncol * itemsize
    if (pl.cdiv(nrow, tr) * pl.cdiv(ncol, tc) == 1
            and total_bytes >= (2 << 20)
            and nrow >= 2 * row_align):
        tr = max(row_align, ((tr // 2) // row_align) * row_align)

    grid = (pl.cdiv(nrow, tr), pl.cdiv(ncol, tc))

    # ---- BlockSpecs ---------------------------------------------------------
    x_spec = pl.BlockSpec((tr, tc), lambda i, j: (i, j))
    if per_row_stats:
        stat_spec = pl.BlockSpec((tr, 1), lambda i, j: (i, 0))
    else:
        stat_spec = pl.BlockSpec((1, tc), lambda i, j: (0, j))
    out_spec = pl.BlockSpec((tr, tc), lambda i, j: (i, j))

    # Scoped VMEM: double-buffered input + output tiles plus headroom, capped
    # so it is safe on v7x (64 MiB physical per TensorCore).
    tile_bytes = tr * tc * itemsize
    vmem_limit = min(_VMEM_CAP_BYTES, max(32 << 20, 4 * tile_bytes + (8 << 20)))

    out2d = pl.pallas_call(
        _scaling_kernel,
        out_shape=jax.ShapeDtypeStruct((nrow, ncol), x.dtype),
        grid=grid,
        in_specs=[x_spec, stat_spec, stat_spec],
        out_specs=out_spec,
        input_output_aliases=({0: 0} if donate_x else {}),
        compiler_params=pltpu.CompilerParams(
            dimension_semantics=("parallel", "parallel"),
            vmem_limit_bytes=vmem_limit,
        ),
    )(x2d, scale2d, bias2d)

    return out2d.reshape(N, C, H, W)


if __name__ == "__main__":
    key = jax.random.PRNGKey(0)
    kx, km, ks = jax.random.split(key, 3)

    # Primary check: 128-friendly spatial dims -> (N*C, H*W) lane-dense path.
    N, C, H, W = 2, 4, 16, 16
    x = jax.random.normal(kx, (N, C, H, W), dtype=jnp.float32)
    mean = jax.random.normal(km, (C,), dtype=jnp.float32) * 0.5
    std = jax.nn.softplus(jax.random.normal(ks, (C,), dtype=jnp.float32)) + 0.5

    out = custom_scaling_layer(x, mean, std)
    out = jax.block_until_ready(out)

    ref = (x - mean[None, :, None, None]) / std[None, :, None, None]
    assert out.shape == x.shape and out.dtype == x.dtype
    # x*(1/std) - mean/std may differ from a true divide by ~1 ulp.
    assert jnp.allclose(out, ref, atol=1e-5, rtol=1e-5)

    # Secondary check: non-128-multiple spatial dims -> (N, C*H*W) fallback.
    x2 = jax.random.normal(kx, (2, 3, 7, 7), dtype=jnp.float32)
    mean2 = jax.random.normal(km, (3,), dtype=jnp.float32) * 0.5
    std2 = jax.nn.softplus(jax.random.normal(ks, (3,), dtype=jnp.float32)) + 0.5
    out2 = jax.block_until_ready(custom_scaling_layer(x2, mean2, std2))
    ref2 = (x2 - mean2[None, :, None, None]) / std2[None, :, None, None]
    assert jnp.allclose(out2, ref2, atol=1e-5, rtol=1e-5)

    print("KERNEL_OK")
</pallas_src>

<mosaic_0001>
module attributes {stable_mosaic.version = 11 : i64} {
  func.func @_scaling_kernel(%arg0: i32, %arg1: i32, %arg2: memref<8x256xf32, #tpu.memory_space<vmem>>, %arg3: memref<8x1xf32, #tpu.memory_space<vmem>>, %arg4: memref<8x1xf32, #tpu.memory_space<vmem>>, %arg5: memref<8x256xf32, #tpu.memory_space<vmem>>) attributes {dimension_semantics = [#tpu.dimension_semantics<parallel>, #tpu.dimension_semantics<parallel>], iteration_bounds = array<i64: 1, 1>, scalar_prefetch = 0 : i64, scratch_operands = 0 : i64, tpu.core_type = #tpu.core_type<tc>, window_params = [{transform_indices = @transform_0, window_bounds = array<i64: 8, 256>}, {transform_indices = @transform_1, window_bounds = array<i64: 8, 1>}, {transform_indices = @transform_2, window_bounds = array<i64: 8, 1>}, {transform_indices = @transform_3, window_bounds = array<i64: 8, 256>}]} {
    %c0 = arith.constant 0 : index
    %c0_0 = arith.constant 0 : index
    %0 = vector.load %arg2[%c0, %c0_0] : memref<8x256xf32, #tpu.memory_space<vmem>>, vector<8x256xf32>
    %c0_1 = arith.constant 0 : index
    %c0_2 = arith.constant 0 : index
    %1 = vector.load %arg3[%c0_1, %c0_2] : memref<8x1xf32, #tpu.memory_space<vmem>>, vector<8x1xf32>
    %2 = vector.broadcast %1 : vector<8x1xf32> to vector<8x256xf32>
    %3 = arith.mulf %0, %2 : vector<8x256xf32>
    %c0_3 = arith.constant 0 : index
    %c0_4 = arith.constant 0 : index
    %4 = vector.load %arg4[%c0_3, %c0_4] : memref<8x1xf32, #tpu.memory_space<vmem>>, vector<8x1xf32>
    %5 = vector.broadcast %4 : vector<8x1xf32> to vector<8x256xf32>
    %6 = arith.subf %3, %5 : vector<8x256xf32>
    %c0_5 = arith.constant 0 : index
    %c0_6 = arith.constant 0 : index
    %7 = vector.load %arg5[%c0_5, %c0_6] : memref<8x256xf32, #tpu.memory_space<vmem>>, vector<8x256xf32>
    tpu.vector_store %arg5[%c0_5, %c0_6], %6 {strides = array<i32>} : memref<8x256xf32, #tpu.memory_space<vmem>>, vector<8x256xf32>,
    return
  }
  func.func @transform_0(%arg0: i32, %arg1: i32) -> (i32, i32) {
    %c0_i32 = arith.constant 0 : i32
    return %arg0, %arg1 : i32, i32
  }
  func.func @transform_1(%arg0: i32, %arg1: i32) -> (i32, i32) {
    %c0_i32 = arith.constant 0 : i32
    %c0_i32_0 = arith.constant 0 : i32
    return %arg0, %c0_i32 : i32, i32
  }
  func.func @transform_2(%arg0: i32, %arg1: i32) -> (i32, i32) {
    %c0_i32 = arith.constant 0 : i32
    %c0_i32_0 = arith.constant 0 : i32
    return %arg0, %c0_i32 : i32, i32
  }
  func.func @transform_3(%arg0: i32, %arg1: i32) -> (i32, i32) {
    %c0_i32 = arith.constant 0 : i32
    return %arg0, %arg1 : i32, i32
  }
}

</mosaic_0001>

<llo_original>
// kernel: tpu_custom_call.1
$region0: #{tpu_custom_call.1}
  #allocation0 [shape = 'u32[]', space=smem, size = 0x4, offset = 0x4, fixed_abs, tag = 'smem constant byte address 0x4 - core index']
  #allocation1 [shape = 'u32[72,128]{1,0:T(1,128)}', space=vmem, size = 0x9000, scoped, tag = 'internal scratch']
  %s0 = inlined_call_operand.vmem [shape: f32[8,256], index: 0, kind: input, shape index: {}]
  %s1 = inlined_call_operand.vmem [shape: f32[8,1], index: 1, kind: input, shape index: {}]
  %s2 = inlined_call_operand.vmem [shape: f32[8,1], index: 2, kind: input, shape index: {}]
  %s3 = inlined_call_operand.hbm [shape: f32[8,256], index: 3, kind: output, shape index: {}]
  %s4 = sld [smem:[#allocation0]]
  $region22: #{tpu_custom_call.1} parent=0
    _
  %s6 = ssub.s32 1, %s4
  %s7 = scalar_select 0, %s6, %s4
  $region1: #{tpu_custom_call.1} parent=0
    #allocation2 [shape = 'u8[8192]{0}', space=vmem, size = 0x2000, scoped, tag = 'output window, operand 0, single buffered']
    #allocation3 [shape = 's32[1]{0}', space=sflag, size = 0x4, scoped, tag = 'scoped memory for tpu_custom_call.1']
    %8 = vsyncpa [#allocation3], 0
    // Predicated region
    $region2: #{tpu_custom_call.1} parent=1 // pred_check
      _
    $region3: #{tpu_custom_call.1} parent=1 // pred_check_branch
      %10 = sbr.rel (0) target = $region5
    $region4: #{tpu_custom_call.1} parent=1 // pred_region
      _
    $region5: #{tpu_custom_call.1} parent=1 // pred_fallthru
      _
    // Predicated region
    $region6: #{tpu_custom_call.1} parent=1 // pred_check
      _
    $region7: #{tpu_custom_call.1} parent=1 // pred_check_branch
      %12 = sbr.rel (0) target = $region9
    $region8: #{tpu_custom_call.1} parent=1 // pred_region
      _
    $region9: #{tpu_custom_call.1} parent=1 // pred_fallthru
      _
    // Predicated region
    $region10: #{tpu_custom_call.1} parent=1 // pred_check
      _
    $region11: #{tpu_custom_call.1} parent=1 // pred_check_branch
      %14 = sbr.rel (0) target = $region13
    $region12: #{tpu_custom_call.1} parent=1 // pred_region
      _
    $region13: #{tpu_custom_call.1} parent=1 // pred_fallthru
      _
    %v15 = vld [vmem:[%s0] sm:$0xff]
    %v16 = vld [vmem:[%s0 + $0x8] sm:$0xff]
    %v17 = vld [vmem:[%s1] sm:$0xff]
    %19 = vset.pattern.permute.xlu0 0
    %20 = vperm.xlu0 %19, %v17
    %v21 = vpop.permute.xlu0 %20
    %v23 = vmul.f32 %v15, %v21
    %v24 = vmul.f32 %v16, %v21
    %v25 = vld [vmem:[%s2] sm:$0xff]
    %27 = vset.pattern.permute.xlu0 0
    %28 = vperm.xlu0 %27, %v25
    %v29 = vpop.permute.xlu0 %28
    %v31 = vsub.f32 %v23, %v29
    %v32 = vsub.f32 %v24, %v29
    %33 = vst [vmem:[#allocation2] sm:$0xff] %v31
    %34 = vst [vmem:[#allocation2 + $0x8] sm:$0xff] %v32
    // Predicated region
    $region14: #{tpu_custom_call.1} parent=1 // pred_check
      _
    $region15: #{tpu_custom_call.1} parent=1 // pred_check_branch
      %36 = sbr.rel (0) target = $region17
    $region16: #{tpu_custom_call.1} parent=1 // pred_region
      %38 = vsyncadd [#allocation3], 0
      %s40 = sshll.u32 [#allocation2], 4
      %s41 = int_to_ptr.vmem [resolvable:$true] %s40
      %s42 = sshll.u32 %s3, 4
      %s43 = int_to_ptr.hbm [resolvable:$true] %s42
      %45 = dma.vmem_to_hbm [thread:$0]  %s41, 256, %s43, [#allocation3]
    $region17: #{tpu_custom_call.1} parent=1 // pred_fallthru
      _
    // Predicated region
    $region18: #{tpu_custom_call.1} parent=1 // pred_check
      _
    $region19: #{tpu_custom_call.1} parent=1 // pred_check_branch
      %47 = sbr.rel (0) target = $region21
    $region20: #{tpu_custom_call.1} parent=1 // pred_region
      %49 = dma.done [#allocation3], 256
    $region21: #{tpu_custom_call.1} parent=1 // pred_fallthru
      _
    %50 = vsyncpa [#allocation3], 1

</llo_original>
